<compile_context>
chip_gen: v5e
topology: v5e:2x2
jax: 0.10.0
libtpu: 0.0.40
codegen_flags: <defaults>
</compile_context>

<pallas_src>
import functools

import jax
import jax.numpy as jnp
import numpy as np
from jax import lax
from jax.experimental import pallas as pl
from jax.experimental.pallas import tpu as pltpu

EPS = 1e-5
# Explicit scoped-VMEM cap: above the v5e 16 MiB / v6e-v7x 32 MiB defaults,
# with headroom under v7x's 64 MiB physical VMEM.
_VMEM_LIMIT = 48 * 1024 * 1024


def _round_up(x, m):
    return (x + m - 1) // m * m


@functools.cache
def _roll_sign() -> int:
    """Pin down pltpu.roll's rotation direction with a tiny eager probe kernel.

    Returns +1 if pltpu.roll(x, s, axis) == jnp.roll(x, s, axis), else -1.
    Must be called OUTSIDE any jit trace (result is cached as a Python int).
    """
    def k(x_ref, o_ref):
        o_ref[...] = pltpu.roll(x_ref[...], 1, axis=0)

    x = jnp.arange(8 * 128, dtype=jnp.float32).reshape(8, 128)
    y = pl.pallas_call(k, out_shape=jax.ShapeDtypeStruct((8, 128), jnp.float32))(x)
    y = jax.block_until_ready(y)
    return 1 if bool(np.allclose(np.asarray(y), np.roll(np.asarray(x), 1, axis=0))) else -1


def _conv_bn_stats_kernel(*refs, Wp, fuse_bn_relu, roll_sign):
    """3x3 same-conv of one image in flat-padded (Rp, C) layout.

    If fuse_bn_relu, first applies the previous BatchNorm (folded to
    scale/shift) + ReLU to the input and re-zeroes the padding rows via the
    mask.  Also emits per-image partial BN stats (sum, sum of squares over the
    H*W valid positions) so global batch stats are obtained without re-reading
    the activation from HBM.
    """
    if fuse_bn_relu:
        (x_ref, mask_ref, scale_ref, shift_ref, w_ref, b_ref,
         y_ref, stats_ref) = refs
    else:
        x_ref, mask_ref, w_ref, b_ref, y_ref, stats_ref = refs

    Rp, C = x_ref.shape
    mask = mask_ref[...]                                  # (Rp, 1) 1.0 valid / 0.0 pad

    x = x_ref[...]                                        # (Rp, C) f32
    if fuse_bn_relu:
        x = jnp.maximum(x * scale_ref[...] + shift_ref[...], 0.0) * mask

    # Tap (dy, dx) corresponds to a flat-row offset of (dy-1)*Wp + (dx-1);
    # pltpu.roll (XLU) replaces unaligned slice+reshape relayout copies.  All
    # wrap-around rows land in the zero right/bottom padding region, so the
    # rotated tile is exactly the zero-padded 'SAME' conv tap.
    acc = jnp.zeros((Rp, C), jnp.float32)
    for dy in range(3):
        for dx in range(3):
            delta = (dy - 1) * Wp + (dx - 1)
            shift = (roll_sign * (-delta)) % Rp
            shifted = pltpu.roll(x, shift, axis=0) if shift != 0 else x
            acc = acc + jnp.dot(shifted.astype(jnp.bfloat16),
                                w_ref[dy * 3 + dx],
                                preferred_element_type=jnp.float32)

    y = acc + b_ref[...]                                  # conv bias
    y_ref[...] = y

    # Partial BN statistics over the valid positions of this image.
    ym = y * mask
    s1 = jnp.sum(ym, axis=0, keepdims=True)               # (1, C) sum
    s2 = jnp.sum(ym * ym, axis=0, keepdims=True)          # (1, C) sum of squares
    stats_ref[...] = jnp.concatenate(
        [s1, s2, jnp.zeros((6, C), jnp.float32)], axis=0)


def _bn_residual_kernel(y_ref, x_ref, scale_ref, shift_ref, o_ref):
    # out = BN2(y2) + x, with BN folded to scale/shift.
    o_ref[...] = y_ref[...] * scale_ref[...] + shift_ref[...] + x_ref[...]


def _conv_bn_stats(x_flat, mask, w_bf16, b_row, scale_row=None, shift_row=None,
                   *, Wp, roll_sign):
    """pallas_call wrapper for one conv (+ optional fused BN/ReLU preprocess)."""
    fuse = scale_row is not None
    N, Rp, C = x_flat.shape

    row_spec = pl.BlockSpec((1, C), lambda n: (0, 0))
    operands = [x_flat, mask]
    in_specs = [pl.BlockSpec((None, Rp, C), lambda n: (n, 0, 0)),
                pl.BlockSpec((Rp, 1), lambda n: (0, 0))]
    if fuse:
        operands += [scale_row, shift_row]
        in_specs += [row_spec, row_spec]
    operands += [w_bf16, b_row]
    in_specs += [pl.BlockSpec((9, C, C), lambda n: (0, 0, 0)), row_spec]

    y, stats = pl.pallas_call(
        functools.partial(_conv_bn_stats_kernel, Wp=Wp, fuse_bn_relu=fuse,
                          roll_sign=roll_sign),
        grid=(N,),
        in_specs=in_specs,
        out_specs=[pl.BlockSpec((None, Rp, C), lambda n: (n, 0, 0)),
                   pl.BlockSpec((None, 8, C), lambda n: (n, 0, 0))],
        out_shape=[jax.ShapeDtypeStruct((N, Rp, C), jnp.float32),
                   jax.ShapeDtypeStruct((N, 8, C), jnp.float32)],
        compiler_params=pltpu.CompilerParams(
            dimension_semantics=("parallel",),
            vmem_limit_bytes=_VMEM_LIMIT),
    )(*operands)
    return y, stats


def _bn_scale_shift(stats, gamma, beta, count):
    """Reduce per-image partial stats into a fused BN scale/shift (1, C)."""
    s1 = jnp.sum(stats[:, 0, :], axis=0)
    s2 = jnp.sum(stats[:, 1, :], axis=0)
    mean = s1 / count
    var = jnp.maximum(s2 / count - mean * mean, 0.0)      # biased (training) var
    inv = lax.rsqrt(var + EPS)
    scale = gamma * inv
    shift = beta - mean * scale
    C = gamma.shape[0]
    return (scale.reshape(1, C).astype(jnp.float32),
            shift.reshape(1, C).astype(jnp.float32))


@functools.partial(jax.jit, static_argnames=("roll_sign",))
def _resblock_forward_impl(x_nchw, params, *, roll_sign):
    w1, b1, g1, be1, w2, b2, g2, be2 = params
    x = jnp.transpose(x_nchw, (0, 2, 3, 1)).astype(jnp.float32)    # NCHW -> NHWC
    N, H, W, C = x.shape
    Hp = H + 2
    Wp = _round_up(W + 2, 8)          # sublane-aligned padded width
    Rp = Hp * Wp

    # "Top-left flat" layout: row h*Wp + w holds pixel (h, w); the right/bottom
    # padding rows are zero.  Padding happens once here in HBM.
    x_tl = jnp.pad(x, ((0, 0), (0, Hp - H), (0, Wp - W), (0, 0))).reshape(N, Rp, C)

    # Validity mask over flat rows (1.0 where (h, w) is a real pixel).
    r = jnp.arange(Rp, dtype=jnp.int32)
    mask = ((r % Wp < W) & (r < H * Wp)).astype(jnp.float32).reshape(Rp, 1)

    # Conv weights HWIO -> (9, Cin, Cout) bf16 (leading tap axis, MXU dtype).
    w1_bf = w1.reshape(9, C, C).astype(jnp.bfloat16)
    w2_bf = w2.reshape(9, C, C).astype(jnp.bfloat16)
    row = lambda v: v.reshape(1, C).astype(jnp.float32)

    count = jnp.float32(N * H * W)

    # conv1 (+ partial BN1 stats)
    y1, st1 = _conv_bn_stats(x_tl, mask, w1_bf, row(b1), Wp=Wp,
                             roll_sign=roll_sign)
    scale1, shift1 = _bn_scale_shift(st1, g1.astype(jnp.float32),
                                     be1.astype(jnp.float32), count)

    # BN1 + ReLU fused into conv2 (+ partial BN2 stats)
    y2, st2 = _conv_bn_stats(y1, mask, w2_bf, row(b2), scale1, shift1, Wp=Wp,
                             roll_sign=roll_sign)
    scale2, shift2 = _bn_scale_shift(st2, g2.astype(jnp.float32),
                                     be2.astype(jnp.float32), count)

    # BN2 + residual add (elementwise epilogue, output aliased onto y2).
    out_flat = pl.pallas_call(
        _bn_residual_kernel,
        grid=(N,),
        in_specs=[pl.BlockSpec((None, Rp, C), lambda n: (n, 0, 0)),
                  pl.BlockSpec((None, Rp, C), lambda n: (n, 0, 0)),
                  pl.BlockSpec((1, C), lambda n: (0, 0)),
                  pl.BlockSpec((1, C), lambda n: (0, 0))],
        out_specs=pl.BlockSpec((None, Rp, C), lambda n: (n, 0, 0)),
        out_shape=jax.ShapeDtypeStruct((N, Rp, C), jnp.float32),
        input_output_aliases={0: 0},
        compiler_params=pltpu.CompilerParams(
            dimension_semantics=("parallel",),
            vmem_limit_bytes=_VMEM_LIMIT),
    )(y2, x_tl, scale2, shift2)

    out = out_flat.reshape(N, Hp, Wp, C)[:, :H, :W, :]
    return jnp.transpose(out, (0, 3, 1, 2))               # NHWC -> NCHW


def resblock_forward(x_nchw, params):
    # The roll-direction probe runs eagerly (cached Python int) BEFORE the jit
    # trace, then is passed as a static argument -- no traced bool conversion.
    return _resblock_forward_impl(x_nchw, params, roll_sign=_roll_sign())


def resblock_reference(x_nchw, params):
    """Pure-JAX f32 reference (same semantics) for correctness checking."""
    w1, b1, g1, be1, w2, b2, g2, be2 = params
    x = jnp.transpose(x_nchw, (0, 2, 3, 1)).astype(jnp.float32)

    def conv(a, w, b):
        y = lax.conv_general_dilated(
            a, w, window_strides=(1, 1), padding='SAME',
            dimension_numbers=('NHWC', 'HWIO', 'NHWC'))
        return y + b

    def bn(y, g, be):
        mean = y.mean(axis=(0, 1, 2), keepdims=True)
        var = ((y - mean) ** 2).mean(axis=(0, 1, 2), keepdims=True)
        return (y - mean) * lax.rsqrt(var + EPS) * g + be

    t = jnp.maximum(bn(conv(x, w1, b1), g1, be1), 0.0)
    t = bn(conv(t, w2, b2), g2, be2)
    out = t + x
    return jnp.transpose(out, (0, 3, 1, 2))


if __name__ == "__main__":
    key = jax.random.PRNGKey(0)
    N, C, H, W = 2, 4, 16, 16
    ks = jax.random.split(key, 9)

    x = jax.random.normal(ks[0], (N, C, H, W), jnp.float32)          # NCHW input
    # Synthetic parameters: conv weights HWIO, BN affine per channel.
    w1 = 0.2 * jax.random.normal(ks[1], (3, 3, C, C), jnp.float32)
    b1 = 0.1 * jax.random.normal(ks[2], (C,), jnp.float32)
    g1 = 1.0 + 0.1 * jax.random.normal(ks[3], (C,), jnp.float32)
    be1 = 0.1 * jax.random.normal(ks[4], (C,), jnp.float32)
    w2 = 0.2 * jax.random.normal(ks[5], (3, 3, C, C), jnp.float32)
    b2 = 0.1 * jax.random.normal(ks[6], (C,), jnp.float32)
    g2 = 1.0 + 0.1 * jax.random.normal(ks[7], (C,), jnp.float32)
    be2 = 0.1 * jax.random.normal(ks[8], (C,), jnp.float32)
    params = (w1, b1, g1, be1, w2, b2, g2, be2)

    out = jax.block_until_ready(resblock_forward(x, params))
    ref = jax.block_until_ready(resblock_reference(x, params))

    assert out.shape == (N, C, H, W) and out.dtype == jnp.float32
    # Conv matmuls run in bf16 on the MXU; reference is pure f32, so allow
    # bf16-level tolerance.
    np.testing.assert_allclose(np.asarray(out), np.asarray(ref),
                               atol=5e-2, rtol=5e-2)
    print("KERNEL_OK")
</pallas_src>

<mosaic_0001>
module attributes {stable_mosaic.version = 11 : i64} {
  func.func @k(%arg0: memref<8x128xf32, #tpu.memory_space<vmem>>, %arg1: memref<8x128xf32, #tpu.memory_space<vmem>>) attributes {dimension_semantics = [], scalar_prefetch = 0 : i64, scratch_operands = 0 : i64, tpu.core_type = #tpu.core_type<tc>} {
    %c0 = arith.constant 0 : index
    %c0_0 = arith.constant 0 : index
    %0 = vector.load %arg0[%c0, %c0_0] : memref<8x128xf32, #tpu.memory_space<vmem>>, vector<8x128xf32>
    %c1_i32 = arith.constant 1 : i32
    %1 = tpu.dynamic_rotate %0 by %c1_i32 dim 0 : vector<8x128xf32>, i32 -> vector<8x128xf32>
    %c0_1 = arith.constant 0 : index
    %c0_2 = arith.constant 0 : index
    %2 = vector.load %arg1[%c0_1, %c0_2] : memref<8x128xf32, #tpu.memory_space<vmem>>, vector<8x128xf32>
    tpu.vector_store %arg1[%c0_1, %c0_2], %1 {strides = array<i32>} : memref<8x128xf32, #tpu.memory_space<vmem>>, vector<8x128xf32>,
    return
  }
}

</mosaic_0001>

<llo_original>
// kernel: tpu_custom_call.1
$region0: #{tpu_custom_call.1}
  #allocation0 [shape = 'u32[]', space=smem, size = 0x4, offset = 0x4, fixed_abs, tag = 'smem constant byte address 0x4 - core index']
  #allocation1 [shape = 'u32[72,128]{1,0:T(1,128)}', space=vmem, size = 0x9000, scoped, tag = 'internal scratch']
  %s0 = inlined_call_operand.hbm [shape: f32[8,128], index: 0, kind: input, shape index: {}]
  %s1 = inlined_call_operand.hbm [shape: f32[8,128], index: 1, kind: output, shape index: {}]
  %s2 = sld [smem:[#allocation0]]
  $region18: #{tpu_custom_call.1} parent=0
    _
  %s4 = ssub.s32 1, %s2
  %s5 = scalar_select 0, %s4, %s2
  $region1: #{tpu_custom_call.1} parent=0
    #allocation2 [shape = 'u8[4096]{0}', space=vmem, size = 0x1000, scoped, tag = 'input window, operand 0, single buffered']
    #allocation3 [shape = 's32[1]{0}', space=sflag, size = 0x4, scoped, tag = 'scoped memory for tpu_custom_call.1']
    #allocation4 [shape = 's32[1]{0}', space=sflag, size = 0x4, scoped, tag = 'scoped memory for tpu_custom_call.1']
    #allocation5 [shape = 'u8[4096]{0}', space=vmem, size = 0x1000, scoped, tag = 'output window, operand 0, single buffered']
    %6 = vsyncpa [#allocation3], 0
    %7 = vsyncpa [#allocation4], 0
    // Predicated region
    $region2: #{tpu_custom_call.1} parent=1 // pred_check
      _
    $region3: #{tpu_custom_call.1} parent=1 // pred_check_branch
      %9 = sbr.rel (0) target = $region5
    $region4: #{tpu_custom_call.1} parent=1 // pred_region
      %11 = vsyncadd [#allocation3], 0
      %s13 = sshll.u32 %s0, 4
      %s14 = int_to_ptr.hbm [resolvable:$true] %s13
      %s15 = sshll.u32 [#allocation2], 4
      %s16 = int_to_ptr.vmem [resolvable:$true] %s15
      %18 = dma.hbm_to_vmem [thread:$0]  %s14, 128, %s16, [#allocation3]
    $region5: #{tpu_custom_call.1} parent=1 // pred_fallthru
      _
    // Predicated region
    $region6: #{tpu_custom_call.1} parent=1 // pred_check
      _
    $region7: #{tpu_custom_call.1} parent=1 // pred_check_branch
      %20 = sbr.rel (0) target = $region9
    $region8: #{tpu_custom_call.1} parent=1 // pred_region
      %22 = dma.done [#allocation3], 128
    $region9: #{tpu_custom_call.1} parent=1 // pred_fallthru
      _
    %v23 = vld [vmem:[#allocation2] sm:$0xff]
    %v24 = vrot.slane %v23, 7
    %25 = vst [vmem:[#allocation5] sm:$0xff] %v24
    // Predicated region
    $region10: #{tpu_custom_call.1} parent=1 // pred_check
      _
    $region11: #{tpu_custom_call.1} parent=1 // pred_check_branch
      %27 = sbr.rel (0) target = $region13
    $region12: #{tpu_custom_call.1} parent=1 // pred_region
      %29 = vsyncadd [#allocation4], 0
      %s31 = sshll.u32 [#allocation5], 4
      %s32 = int_to_ptr.vmem [resolvable:$true] %s31
      %s33 = sshll.u32 %s1, 4
      %s34 = int_to_ptr.hbm [resolvable:$true] %s33
      %36 = dma.vmem_to_hbm [thread:$0]  %s32, 128, %s34, [#allocation4]
    $region13: #{tpu_custom_call.1} parent=1 // pred_fallthru
      _
    // Predicated region
    $region14: #{tpu_custom_call.1} parent=1 // pred_check
      _
    $region15: #{tpu_custom_call.1} parent=1 // pred_check_branch
      %38 = sbr.rel (0) target = $region17
    $region16: #{tpu_custom_call.1} parent=1 // pred_region
      %40 = dma.done [#allocation4], 128
    $region17: #{tpu_custom_call.1} parent=1 // pred_fallthru
      _
    %41 = vsyncpa [#allocation3], 1
    %42 = vsyncpa [#allocation4], 1

</llo_original>
